<compile_context>
chip_gen: v7x
topology: tpu7x:2x2x1
jax: 0.10.0
libtpu: 0.0.40
codegen_flags: <defaults>
</compile_context>

<pallas_src>
import jax
import jax.numpy as jnp
from jax.experimental import pallas as pl
from jax.experimental.pallas import tpu as pltpu


# ---------------------------------------------------------------------------
# Kernel 1/3: affine map  out = x @ w + b   (input projection and FC head)
# ---------------------------------------------------------------------------
def affine_kernel(x_ref, w_ref, b_ref, out_ref):
    out_ref[...] = (
        jnp.dot(x_ref[...], w_ref[...], preferred_element_type=jnp.float32)
        + b_ref[...]
    ).astype(out_ref.dtype)


def _affine(x, w, b):
    """x: (M, K), w: (K, N), b: (1, N)  ->  (M, N), rows tiled with a parallel grid."""
    M, K = x.shape
    N = w.shape[1]

    # Row tile: largest multiple-of-128 tile that divides M, else one full block
    # (full-block shapes always satisfy the (8, 128) BlockSpec constraint).
    row_tile = M
    for cand in (512, 256, 128):
        if M > cand and M % cand == 0:
            row_tile = cand
            break
    grid = (M // row_tile,)

    return pl.pallas_call(
        affine_kernel,
        out_shape=jax.ShapeDtypeStruct((M, N), jnp.float32),
        grid_spec=pltpu.PrefetchScalarGridSpec(
            num_scalar_prefetch=0,
            grid=grid,
            in_specs=[
                pl.BlockSpec((row_tile, K), lambda i: (i, 0)),
                pl.BlockSpec((K, N), lambda i: (0, 0)),
                pl.BlockSpec((1, N), lambda i: (0, 0)),
            ],
            out_specs=pl.BlockSpec((row_tile, N), lambda i: (i, 0)),
        ),
        compiler_params=pltpu.CompilerParams(
            dimension_semantics=("parallel",),  # rows independent -> megacore-friendly
        ),
    )(x, w, b)


# ---------------------------------------------------------------------------
# Kernel 2/3: serial tanh recurrence, time-chunked grid with resident carry.
#   h_t = tanh(xw[:, t, :] + h_{t-1} @ W_hh^T)
# ---------------------------------------------------------------------------
def rnn_recurrence_kernel(xw_ref, h0_ref, whh_ref, h_all_ref, h_final_ref):
    B, TC, H = xw_ref.shape  # TC = static time-chunk length (inner loop unrolled)
    tc = pl.program_id(0)

    # Initialize the carry from h0 on the first chunk; afterwards h_final_ref
    # is the resident carry (same output block every grid step).
    @pl.when(tc == 0)
    def _():
        h_final_ref[...] = h0_ref[...].astype(h_final_ref.dtype)

    whh = whh_ref[...]        # hoisted: loaded once per chunk, reused every step
    h = h_final_ref[...]      # carry held in a loop variable inside the chunk

    # TC is a static block dim -> Python loop == fully unrolled, static indices.
    for t in range(TC):
        pre = (
            xw_ref[:, pl.ds(t, 1), :].reshape(B, H)
            + jnp.dot(h, whh, preferred_element_type=jnp.float32)
        )
        h = jnp.tanh(pre)
        h_all_ref[:, pl.ds(t, 1), :] = h[:, None, :].astype(h_all_ref.dtype)

    h_final_ref[...] = h.astype(h_final_ref.dtype)  # carry out / final hidden


def _pick_time_chunk(T):
    """Whole sequence if small; otherwise the largest nice divisor <= 128."""
    if T <= 128:
        return T
    for cand in (128, 64, 32, 16, 8):
        if T % cand == 0:
            return cand
    return T  # fall back: single chunk (correct, just more VMEM)


def _recurrence(xw_bth, h0_bh, whh_t):
    B, T, H = xw_bth.shape
    tc = _pick_time_chunk(T)
    grid = (T // tc,)

    return pl.pallas_call(
        rnn_recurrence_kernel,
        out_shape=(
            jax.ShapeDtypeStruct((B, T, H), jnp.float32),
            jax.ShapeDtypeStruct((B, H), jnp.float32),
        ),
        grid_spec=pltpu.PrefetchScalarGridSpec(
            num_scalar_prefetch=0,
            grid=grid,
            in_specs=[
                pl.BlockSpec((B, tc, H), lambda i: (0, i, 0)),  # xw chunk
                pl.BlockSpec((B, H), lambda i: (0, 0)),         # h0
                pl.BlockSpec((H, H), lambda i: (0, 0)),         # W_hh^T
            ],
            out_specs=[
                pl.BlockSpec((B, tc, H), lambda i: (0, i, 0)),  # hidden states chunk
                pl.BlockSpec((B, H), lambda i: (0, 0)),         # resident carry / final h
            ],
        ),
        compiler_params=pltpu.CompilerParams(
            dimension_semantics=("arbitrary",),  # sequential dependence across chunks
        ),
    )(xw_bth, h0_bh, whh_t)


# ---------------------------------------------------------------------------
# Forward pass matching CharRNN.forward
# ---------------------------------------------------------------------------
@jax.jit
def char_rnn_forward(x_btv, h0_lbh, w_ih, w_hh, b_ih, b_hh, w_fc, b_fc):
    """x_btv: (B, T, V); h0_lbh: (1, B, H); PyTorch-layout params.
    Returns: logits (B*T, V), hidden (1, B, H)."""
    B, T, V = x_btv.shape
    H = w_hh.shape[0]

    # Glue (cheap): flatten x row-major (free), transpose only the small weights.
    x_flat = x_btv.reshape(B * T, V).astype(jnp.float32)      # (B*T, V)
    h0 = h0_lbh[0].astype(jnp.float32)                        # (B, H)
    wih_t = jnp.transpose(w_ih).astype(jnp.float32)           # (V, H)
    whh_t = jnp.transpose(w_hh).astype(jnp.float32)           # (H, H)
    b_rnn = (b_ih + b_hh).reshape(1, H).astype(jnp.float32)   # (1, H)
    wfc_t = jnp.transpose(w_fc).astype(jnp.float32)           # (H, V)
    bfc = b_fc.reshape(1, V).astype(jnp.float32)               # (1, V)

    # 1) Input projection for every timestep (parallel, off the serial path).
    xw = _affine(x_flat, wih_t, b_rnn).reshape(B, T, H)

    # 2) Serial tanh recurrence (time-chunked grid, unrolled inner loop).
    h_all, h_final = _recurrence(xw, h0, whh_t)

    # 3) FC head on the flattened hidden states; output rows already in
    #    batch_first order b*T + t, so no transpose anywhere.
    logits = _affine(h_all.reshape(B * T, H), wfc_t, bfc)

    return logits, h_final[None, :, :]


def _jax_reference(x_btv, h0_lbh, w_ih, w_hh, b_ih, b_hh, w_fc, b_fc):
    """Pure-JAX reference of the same forward pass (for validation)."""
    B, T, V = x_btv.shape
    h = h0_lbh[0]
    outs = []
    for t in range(T):
        h = jnp.tanh(x_btv[:, t, :] @ w_ih.T + b_ih + h @ w_hh.T + b_hh)
        outs.append(h)
    out = jnp.stack(outs, axis=1)                      # (B, T, H)
    logits = out.reshape(B * T, -1) @ w_fc.T + b_fc    # (B*T, V)
    return logits, h[None]


if __name__ == "__main__":
    # Small shapes consistent with the module: one-hot-ish char inputs.
    B, T, V, H = 2, 8, 16, 32
    num_layers = 1

    key = jax.random.PRNGKey(0)
    ks = jax.random.split(key, 7)

    # Deterministic parameter init (PyTorch-style uniform(-1/sqrt(H), 1/sqrt(H))).
    bound = 1.0 / jnp.sqrt(jnp.float32(H))
    w_ih = jax.random.uniform(ks[0], (H, V), jnp.float32, -bound, bound)
    w_hh = jax.random.uniform(ks[1], (H, H), jnp.float32, -bound, bound)
    b_ih = jax.random.uniform(ks[2], (H,), jnp.float32, -bound, bound)
    b_hh = jax.random.uniform(ks[3], (H,), jnp.float32, -bound, bound)
    w_fc = jax.random.uniform(ks[4], (V, H), jnp.float32, -bound, bound)
    b_fc = jax.random.uniform(ks[5], (V,), jnp.float32, -bound, bound)

    x = jax.random.normal(ks[6], (B, T, V), jnp.float32)
    h0 = jnp.zeros((num_layers, B, H), jnp.float32)   # init_hidden(batch_size)

    logits, hidden = char_rnn_forward(x, h0, w_ih, w_hh, b_ih, b_hh, w_fc, b_fc)
    jax.block_until_ready((logits, hidden))

    ref_logits, ref_hidden = _jax_reference(x, h0, w_ih, w_hh, b_ih, b_hh, w_fc, b_fc)
    assert logits.shape == (B * T, V)
    assert hidden.shape == (num_layers, B, H)
    assert jnp.allclose(logits, ref_logits, atol=1e-5, rtol=1e-5)
    assert jnp.allclose(hidden, ref_hidden, atol=1e-5, rtol=1e-5)

    print("KERNEL_OK")
</pallas_src>

<mosaic_0001>
module attributes {stable_mosaic.version = 11 : i64} {
  func.func @rnn_recurrence_kernel(%arg0: i32, %arg1: memref<2x8x32xf32, #tpu.memory_space<vmem>>, %arg2: memref<2x32xf32, #tpu.memory_space<vmem>>, %arg3: memref<32x32xf32, #tpu.memory_space<vmem>>, %arg4: memref<2x8x32xf32, #tpu.memory_space<vmem>>, %arg5: memref<2x32xf32, #tpu.memory_space<vmem>>) attributes {dimension_semantics = [#tpu.dimension_semantics<arbitrary>], iteration_bounds = array<i64: 1>, scalar_prefetch = 0 : i64, scratch_operands = 0 : i64, tpu.core_type = #tpu.core_type<tc>, window_params = [{transform_indices = @transform_0, window_bounds = array<i64: 2, 8, 32>}, {pipeline_mode = #tpu.pipeline_mode<synchronous>, transform_indices = @transform_1, window_bounds = array<i64: 2, 32>}, {pipeline_mode = #tpu.pipeline_mode<synchronous>, transform_indices = @transform_2, window_bounds = array<i64: 32, 32>}, {transform_indices = @transform_3, window_bounds = array<i64: 2, 8, 32>}, {pipeline_mode = #tpu.pipeline_mode<synchronous>, transform_indices = @transform_4, window_bounds = array<i64: 2, 32>}]} {
    %c0_i32 = arith.constant 0 : i32
    %0 = arith.cmpi eq, %arg0, %c0_i32 : i32
    %1 = arith.extui %0 : i1 to i32
    %c0_i32_0 = arith.constant 0 : i32
    %2 = arith.cmpi ne, %1, %c0_i32_0 : i32
    scf.if %2 {
      %c0_54 = arith.constant 0 : index
      %c0_55 = arith.constant 0 : index
      %62 = vector.load %arg2[%c0_54, %c0_55] : memref<2x32xf32, #tpu.memory_space<vmem>>, vector<2x32xf32>
      %c0_56 = arith.constant 0 : index
      %c0_57 = arith.constant 0 : index
      %63 = vector.load %arg5[%c0_56, %c0_57] : memref<2x32xf32, #tpu.memory_space<vmem>>, vector<2x32xf32>
      tpu.vector_store %arg5[%c0_56, %c0_57], %62 {strides = array<i32>} : memref<2x32xf32, #tpu.memory_space<vmem>>, vector<2x32xf32>,
    } else {
    }
    %c0 = arith.constant 0 : index
    %c0_1 = arith.constant 0 : index
    %3 = vector.load %arg3[%c0, %c0_1] : memref<32x32xf32, #tpu.memory_space<vmem>>, vector<32x32xf32>
    %c0_2 = arith.constant 0 : index
    %c0_3 = arith.constant 0 : index
    %4 = vector.load %arg5[%c0_2, %c0_3] : memref<2x32xf32, #tpu.memory_space<vmem>>, vector<2x32xf32>
    %c0_4 = arith.constant 0 : index
    %c0_5 = arith.constant 0 : index
    %c0_6 = arith.constant 0 : index
    %5 = vector.load %arg1[%c0_4, %c0_5, %c0_6] : memref<2x8x32xf32, #tpu.memory_space<vmem>>, vector<2x1x32xf32>
    %6 = vector.shape_cast %5 : vector<2x1x32xf32> to vector<2x32xf32>
    %cst = arith.constant dense<0.000000e+00> : vector<2x32xf32>
    %7 = tpu.matmul %4, %3, %cst {dimension_numbers = #tpu.dot_dimension_numbers<[1], [0], [0], [1], [0, 0, 1, 1], [], []>} : vector<2x32xf32>, vector<32x32xf32>, vector<2x32xf32> -> vector<2x32xf32>
    %8 = arith.addf %6, %7 : vector<2x32xf32>
    %9 = math.tanh %8 : vector<2x32xf32>
    %10 = vector.shape_cast %9 : vector<2x32xf32> to vector<2x1x32xf32>
    %c0_7 = arith.constant 0 : index
    %c0_8 = arith.constant 0 : index
    %c0_9 = arith.constant 0 : index
    %11 = vector.load %arg4[%c0_7, %c0_8, %c0_9] : memref<2x8x32xf32, #tpu.memory_space<vmem>>, vector<2x1x32xf32>
    tpu.vector_store %arg4[%c0_7, %c0_8, %c0_9], %10 {strides = array<i32>} : memref<2x8x32xf32, #tpu.memory_space<vmem>>, vector<2x1x32xf32>,
    %c0_10 = arith.constant 0 : index
    %c1 = arith.constant 1 : index
    %c0_11 = arith.constant 0 : index
    %12 = vector.load %arg1[%c0_10, %c1, %c0_11] : memref<2x8x32xf32, #tpu.memory_space<vmem>>, vector<2x1x32xf32>
    %13 = vector.shape_cast %12 : vector<2x1x32xf32> to vector<2x32xf32>
    %cst_12 = arith.constant dense<0.000000e+00> : vector<2x32xf32>
    %14 = tpu.matmul %9, %3, %cst_12 {dimension_numbers = #tpu.dot_dimension_numbers<[1], [0], [0], [1], [0, 0, 1, 1], [], []>} : vector<2x32xf32>, vector<32x32xf32>, vector<2x32xf32> -> vector<2x32xf32>
    %15 = arith.addf %13, %14 : vector<2x32xf32>
    %16 = math.tanh %15 : vector<2x32xf32>
    %17 = vector.shape_cast %16 : vector<2x32xf32> to vector<2x1x32xf32>
    %c0_13 = arith.constant 0 : index
    %c1_14 = arith.constant 1 : index
    %c0_15 = arith.constant 0 : index
    %18 = vector.load %arg4[%c0_13, %c1_14, %c0_15] : memref<2x8x32xf32, #tpu.memory_space<vmem>>, vector<2x1x32xf32>
    tpu.vector_store %arg4[%c0_13, %c1_14, %c0_15], %17 {strides = array<i32>} : memref<2x8x32xf32, #tpu.memory_space<vmem>>, vector<2x1x32xf32>,
    %c0_16 = arith.constant 0 : index
    %c2 = arith.constant 2 : index
    %c0_17 = arith.constant 0 : index
    %19 = vector.load %arg1[%c0_16, %c2, %c0_17] : memref<2x8x32xf32, #tpu.memory_space<vmem>>, vector<2x1x32xf32>
    %20 = vector.shape_cast %19 : vector<2x1x32xf32> to vector<2x32xf32>
    %cst_18 = arith.constant dense<0.000000e+00> : vector<2x32xf32>
    %21 = tpu.matmul %16, %3, %cst_18 {dimension_numbers = #tpu.dot_dimension_numbers<[1], [0], [0], [1], [0, 0, 1, 1], [], []>} : vector<2x32xf32>, vector<32x32xf32>, vector<2x32xf32> -> vector<2x32xf32>
    %22 = arith.addf %20, %21 : vector<2x32xf32>
    %23 = math.tanh %22 : vector<2x32xf32>
    %24 = vector.shape_cast %23 : vector<2x32xf32> to vector<2x1x32xf32>
    %c0_19 = arith.constant 0 : index
    %c2_20 = arith.constant 2 : index
    %c0_21 = arith.constant 0 : index
    %25 = vector.load %arg4[%c0_19, %c2_20, %c0_21] : memref<2x8x32xf32, #tpu.memory_space<vmem>>, vector<2x1x32xf32>
    tpu.vector_store %arg4[%c0_19, %c2_20, %c0_21], %24 {strides = array<i32>} : memref<2x8x32xf32, #tpu.memory_space<vmem>>, vector<2x1x32xf32>,
    %c0_22 = arith.constant 0 : index
    %c3 = arith.constant 3 : index
    %c0_23 = arith.constant 0 : index
    %26 = vector.load %arg1[%c0_22, %c3, %c0_23] : memref<2x8x32xf32, #tpu.memory_space<vmem>>, vector<2x1x32xf32>
    %27 = vector.shape_cast %26 : vector<2x1x32xf32> to vector<2x32xf32>
    %cst_24 = arith.constant dense<0.000000e+00> : vector<2x32xf32>
    %28 = tpu.matmul %23, %3, %cst_24 {dimension_numbers = #tpu.dot_dimension_numbers<[1], [0], [0], [1], [0, 0, 1, 1], [], []>} : vector<2x32xf32>, vector<32x32xf32>, vector<2x32xf32> -> vector<2x32xf32>
    %29 = arith.addf %27, %28 : vector<2x32xf32>
    %30 = math.tanh %29 : vector<2x32xf32>
    %31 = vector.shape_cast %30 : vector<2x32xf32> to vector<2x1x32xf32>
    %c0_25 = arith.constant 0 : index
    %c3_26 = arith.constant 3 : index
    %c0_27 = arith.constant 0 : index
    %32 = vector.load %arg4[%c0_25, %c3_26, %c0_27] : memref<2x8x32xf32, #tpu.memory_space<vmem>>, vector<2x1x32xf32>
    tpu.vector_store %arg4[%c0_25, %c3_26, %c0_27], %31 {strides = array<i32>} : memref<2x8x32xf32, #tpu.memory_space<vmem>>, vector<2x1x32xf32>,
    %c0_28 = arith.constant 0 : index
    %c4 = arith.constant 4 : index
    %c0_29 = arith.constant 0 : index
    %33 = vector.load %arg1[%c0_28, %c4, %c0_29] : memref<2x8x32xf32, #tpu.memory_space<vmem>>, vector<2x1x32xf32>
    %34 = vector.shape_cast %33 : vector<2x1x32xf32> to vector<2x32xf32>
    %cst_30 = arith.constant dense<0.000000e+00> : vector<2x32xf32>
    %35 = tpu.matmul %30, %3, %cst_30 {dimension_numbers = #tpu.dot_dimension_numbers<[1], [0], [0], [1], [0, 0, 1, 1], [], []>} : vector<2x32xf32>, vector<32x32xf32>, vector<2x32xf32> -> vector<2x32xf32>
    %36 = arith.addf %34, %35 : vector<2x32xf32>
    %37 = math.tanh %36 : vector<2x32xf32>
    %38 = vector.shape_cast %37 : vector<2x32xf32> to vector<2x1x32xf32>
    %c0_31 = arith.constant 0 : index
    %c4_32 = arith.constant 4 : index
    %c0_33 = arith.constant 0 : index
    %39 = vector.load %arg4[%c0_31, %c4_32, %c0_33] : memref<2x8x32xf32, #tpu.memory_space<vmem>>, vector<2x1x32xf32>
    tpu.vector_store %arg4[%c0_31, %c4_32, %c0_33], %38 {strides = array<i32>} : memref<2x8x32xf32, #tpu.memory_space<vmem>>, vector<2x1x32xf32>,
    %c0_34 = arith.constant 0 : index
    %c5 = arith.constant 5 : index
    %c0_35 = arith.constant 0 : index
    %40 = vector.load %arg1[%c0_34, %c5, %c0_35] : memref<2x8x32xf32, #tpu.memory_space<vmem>>, vector<2x1x32xf32>
    %41 = vector.shape_cast %40 : vector<2x1x32xf32> to vector<2x32xf32>
    %cst_36 = arith.constant dense<0.000000e+00> : vector<2x32xf32>
    %42 = tpu.matmul %37, %3, %cst_36 {dimension_numbers = #tpu.dot_dimension_numbers<[1], [0], [0], [1], [0, 0, 1, 1], [], []>} : vector<2x32xf32>, vector<32x32xf32>, vector<2x32xf32> -> vector<2x32xf32>
    %43 = arith.addf %41, %42 : vector<2x32xf32>
    %44 = math.tanh %43 : vector<2x32xf32>
    %45 = vector.shape_cast %44 : vector<2x32xf32> to vector<2x1x32xf32>
    %c0_37 = arith.constant 0 : index
    %c5_38 = arith.constant 5 : index
    %c0_39 = arith.constant 0 : index
    %46 = vector.load %arg4[%c0_37, %c5_38, %c0_39] : memref<2x8x32xf32, #tpu.memory_space<vmem>>, vector<2x1x32xf32>
    tpu.vector_store %arg4[%c0_37, %c5_38, %c0_39], %45 {strides = array<i32>} : memref<2x8x32xf32, #tpu.memory_space<vmem>>, vector<2x1x32xf32>,
    %c0_40 = arith.constant 0 : index
    %c6 = arith.constant 6 : index
    %c0_41 = arith.constant 0 : index
    %47 = vector.load %arg1[%c0_40, %c6, %c0_41] : memref<2x8x32xf32, #tpu.memory_space<vmem>>, vector<2x1x32xf32>
    %48 = vector.shape_cast %47 : vector<2x1x32xf32> to vector<2x32xf32>
    %cst_42 = arith.constant dense<0.000000e+00> : vector<2x32xf32>
    %49 = tpu.matmul %44, %3, %cst_42 {dimension_numbers = #tpu.dot_dimension_numbers<[1], [0], [0], [1], [0, 0, 1, 1], [], []>} : vector<2x32xf32>, vector<32x32xf32>, vector<2x32xf32> -> vector<2x32xf32>
    %50 = arith.addf %48, %49 : vector<2x32xf32>
    %51 = math.tanh %50 : vector<2x32xf32>
    %52 = vector.shape_cast %51 : vector<2x32xf32> to vector<2x1x32xf32>
    %c0_43 = arith.constant 0 : index
    %c6_44 = arith.constant 6 : index
    %c0_45 = arith.constant 0 : index
    %53 = vector.load %arg4[%c0_43, %c6_44, %c0_45] : memref<2x8x32xf32, #tpu.memory_space<vmem>>, vector<2x1x32xf32>
    tpu.vector_store %arg4[%c0_43, %c6_44, %c0_45], %52 {strides = array<i32>} : memref<2x8x32xf32, #tpu.memory_space<vmem>>, vector<2x1x32xf32>,
    %c0_46 = arith.constant 0 : index
    %c7 = arith.constant 7 : index
    %c0_47 = arith.constant 0 : index
    %54 = vector.load %arg1[%c0_46, %c7, %c0_47] : memref<2x8x32xf32, #tpu.memory_space<vmem>>, vector<2x1x32xf32>
    %55 = vector.shape_cast %54 : vector<2x1x32xf32> to vector<2x32xf32>
    %cst_48 = arith.constant dense<0.000000e+00> : vector<2x32xf32>
    %56 = tpu.matmul %51, %3, %cst_48 {dimension_numbers = #tpu.dot_dimension_numbers<[1], [0], [0], [1], [0, 0, 1, 1], [], []>} : vector<2x32xf32>, vector<32x32xf32>, vector<2x32xf32> -> vector<2x32xf32>
    %57 = arith.addf %55, %56 : vector<2x32xf32>
    %58 = math.tanh %57 : vector<2x32xf32>
    %59 = vector.shape_cast %58 : vector<2x32xf32> to vector<2x1x32xf32>
    %c0_49 = arith.constant 0 : index
    %c7_50 = arith.constant 7 : index
    %c0_51 = arith.constant 0 : index
    %60 = vector.load %arg4[%c0_49, %c7_50, %c0_51] : memref<2x8x32xf32, #tpu.memory_space<vmem>>, vector<2x1x32xf32>
    tpu.vector_store %arg4[%c0_49, %c7_50, %c0_51], %59 {strides = array<i32>} : memref<2x8x32xf32, #tpu.memory_space<vmem>>, vector<2x1x32xf32>,
    %c0_52 = arith.constant 0 : index
    %c0_53 = arith.constant 0 : index
    %61 = vector.load %arg5[%c0_52, %c0_53] : memref<2x32xf32, #tpu.memory_space<vmem>>, vector<2x32xf32>
    tpu.vector_store %arg5[%c0_52, %c0_53], %58 {strides = array<i32>} : memref<2x32xf32, #tpu.memory_space<vmem>>, vector<2x32xf32>,
    return
  }
  func.func @transform_0(%arg0: i32) -> (i32, i32, i32) {
    %c0_i32 = arith.constant 0 : i32
    %c0_i32_0 = arith.constant 0 : i32
    %c0_i32_1 = arith.constant 0 : i32
    return %c0_i32, %arg0, %c0_i32_0 : i32, i32, i32
  }
  func.func @transform_1(%arg0: i32) -> (i32, i32) {
    %c0_i32 = arith.constant 0 : i32
    %c0_i32_0 = arith.constant 0 : i32
    %c0_i32_1 = arith.constant 0 : i32
    return %c0_i32, %c0_i32_0 : i32, i32
  }
  func.func @transform_2(%arg0: i32) -> (i32, i32) {
    %c0_i32 = arith.constant 0 : i32
    %c0_i32_0 = arith.constant 0 : i32
    %c0_i32_1 = arith.constant 0 : i32
    return %c0_i32, %c0_i32_0 : i32, i32
  }
  func.func @transform_3(%arg0: i32) -> (i32, i32, i32) {
    %c0_i32 = arith.constant 0 : i32
    %c0_i32_0 = arith.constant 0 : i32
    %c0_i32_1 = arith.constant 0 : i32
    return %c0_i32, %arg0, %c0_i32_0 : i32, i32, i32
  }
  func.func @transform_4(%arg0: i32) -> (i32, i32) {
    %c0_i32 = arith.constant 0 : i32
    %c0_i32_0 = arith.constant 0 : i32
    %c0_i32_1 = arith.constant 0 : i32
    return %c0_i32, %c0_i32_0 : i32, i32
  }
}

module attributes {stable_mosaic.version = 11 : i64} {
  func.func @affine_kernel(%arg0: i32, %arg1: memref<16x16xf32, #tpu.memory_space<vmem>>, %arg2: memref<16x32xf32, #tpu.memory_space<vmem>>, %arg3: memref<1x32xf32, #tpu.memory_space<vmem>>, %arg4: memref<16x32xf32, #tpu.memory_space<vmem>>) attributes {dimension_semantics = [#tpu.dimension_semantics<parallel>], iteration_bounds = array<i64: 1>, scalar_prefetch = 0 : i64, scratch_operands = 0 : i64, tpu.core_type = #tpu.core_type<tc>, window_params = [{transform_indices = @transform_0, window_bounds = array<i64: 16, 16>}, {pipeline_mode = #tpu.pipeline_mode<synchronous>, transform_indices = @transform_1, window_bounds = array<i64: 16, 32>}, {pipeline_mode = #tpu.pipeline_mode<synchronous>, transform_indices = @transform_2, window_bounds = array<i64: 1, 32>}, {transform_indices = @transform_3, window_bounds = array<i64: 16, 32>}]} {
    %c0 = arith.constant 0 : index
    %c0_0 = arith.constant 0 : index
    %0 = vector.load %arg1[%c0, %c0_0] : memref<16x16xf32, #tpu.memory_space<vmem>>, vector<16x16xf32>
    %c0_1 = arith.constant 0 : index
    %c0_2 = arith.constant 0 : index
    %1 = vector.load %arg2[%c0_1, %c0_2] : memref<16x32xf32, #tpu.memory_space<vmem>>, vector<16x32xf32>
    %cst = arith.constant dense<0.000000e+00> : vector<16x32xf32>
    %2 = tpu.matmul %0, %1, %cst {dimension_numbers = #tpu.dot_dimension_numbers<[1], [0], [0], [1], [0, 0, 1, 1], [], []>} : vector<16x16xf32>, vector<16x32xf32>, vector<16x32xf32> -> vector<16x32xf32>
    %c0_3 = arith.constant 0 : index
    %c0_4 = arith.constant 0 : index
    %3 = vector.load %arg3[%c0_3, %c0_4] : memref<1x32xf32, #tpu.memory_space<vmem>>, vector<1x32xf32>
    %4 = vector.broadcast %3 : vector<1x32xf32> to vector<16x32xf32>
    %5 = arith.addf %2, %4 : vector<16x32xf32>
    %c0_5 = arith.constant 0 : index
    %c0_6 = arith.constant 0 : index
    %6 = vector.load %arg4[%c0_5, %c0_6] : memref<16x32xf32, #tpu.memory_space<vmem>>, vector<16x32xf32>
    tpu.vector_store %arg4[%c0_5, %c0_6], %5 {strides = array<i32>} : memref<16x32xf32, #tpu.memory_space<vmem>>, vector<16x32xf32>,
    return
  }
  func.func @transform_0(%arg0: i32) -> (i32, i32) {
    %c0_i32 = arith.constant 0 : i32
    %c0_i32_0 = arith.constant 0 : i32
    return %arg0, %c0_i32 : i32, i32
  }
  func.func @transform_1(%arg0: i32) -> (i32, i32) {
    %c0_i32 = arith.constant 0 : i32
    %c0_i32_0 = arith.constant 0 : i32
    %c0_i32_1 = arith.constant 0 : i32
    return %c0_i32, %c0_i32_0 : i32, i32
  }
  func.func @transform_2(%arg0: i32) -> (i32, i32) {
    %c0_i32 = arith.constant 0 : i32
    %c0_i32_0 = arith.constant 0 : i32
    %c0_i32_1 = arith.constant 0 : i32
    return %c0_i32, %c0_i32_0 : i32, i32
  }
  func.func @transform_3(%arg0: i32) -> (i32, i32) {
    %c0_i32 = arith.constant 0 : i32
    %c0_i32_0 = arith.constant 0 : i32
    return %arg0, %c0_i32 : i32, i32
  }
}

module attributes {stable_mosaic.version = 11 : i64} {
  func.func @affine_kernel(%arg0: i32, %arg1: memref<16x32xf32, #tpu.memory_space<vmem>>, %arg2: memref<32x16xf32, #tpu.memory_space<vmem>>, %arg3: memref<1x16xf32, #tpu.memory_space<vmem>>, %arg4: memref<16x16xf32, #tpu.memory_space<vmem>>) attributes {dimension_semantics = [#tpu.dimension_semantics<parallel>], iteration_bounds = array<i64: 1>, scalar_prefetch = 0 : i64, scratch_operands = 0 : i64, tpu.core_type = #tpu.core_type<tc>, window_params = [{transform_indices = @transform_0, window_bounds = array<i64: 16, 32>}, {pipeline_mode = #tpu.pipeline_mode<synchronous>, transform_indices = @transform_1, window_bounds = array<i64: 32, 16>}, {pipeline_mode = #tpu.pipeline_mode<synchronous>, transform_indices = @transform_2, window_bounds = array<i64: 1, 16>}, {transform_indices = @transform_3, window_bounds = array<i64: 16, 16>}]} {
    %c0 = arith.constant 0 : index
    %c0_0 = arith.constant 0 : index
    %0 = vector.load %arg1[%c0, %c0_0] : memref<16x32xf32, #tpu.memory_space<vmem>>, vector<16x32xf32>
    %c0_1 = arith.constant 0 : index
    %c0_2 = arith.constant 0 : index
    %1 = vector.load %arg2[%c0_1, %c0_2] : memref<32x16xf32, #tpu.memory_space<vmem>>, vector<32x16xf32>
    %cst = arith.constant dense<0.000000e+00> : vector<16x16xf32>
    %2 = tpu.matmul %0, %1, %cst {dimension_numbers = #tpu.dot_dimension_numbers<[1], [0], [0], [1], [0, 0, 1, 1], [], []>} : vector<16x32xf32>, vector<32x16xf32>, vector<16x16xf32> -> vector<16x16xf32>
    %c0_3 = arith.constant 0 : index
    %c0_4 = arith.constant 0 : index
    %3 = vector.load %arg3[%c0_3, %c0_4] : memref<1x16xf32, #tpu.memory_space<vmem>>, vector<1x16xf32>
    %4 = vector.broadcast %3 : vector<1x16xf32> to vector<16x16xf32>
    %5 = arith.addf %2, %4 : vector<16x16xf32>
    %c0_5 = arith.constant 0 : index
    %c0_6 = arith.constant 0 : index
    %6 = vector.load %arg4[%c0_5, %c0_6] : memref<16x16xf32, #tpu.memory_space<vmem>>, vector<16x16xf32>
    tpu.vector_store %arg4[%c0_5, %c0_6], %5 {strides = array<i32>} : memref<16x16xf32, #tpu.memory_space<vmem>>, vector<16x16xf32>,
    return
  }
  func.func @transform_0(%arg0: i32) -> (i32, i32) {
    %c0_i32 = arith.constant 0 : i32
    %c0_i32_0 = arith.constant 0 : i32
    return %arg0, %c0_i32 : i32, i32
  }
  func.func @transform_1(%arg0: i32) -> (i32, i32) {
    %c0_i32 = arith.constant 0 : i32
    %c0_i32_0 = arith.constant 0 : i32
    %c0_i32_1 = arith.constant 0 : i32
    return %c0_i32, %c0_i32_0 : i32, i32
  }
  func.func @transform_2(%arg0: i32) -> (i32, i32) {
    %c0_i32 = arith.constant 0 : i32
    %c0_i32_0 = arith.constant 0 : i32
    %c0_i32_1 = arith.constant 0 : i32
    return %c0_i32, %c0_i32_0 : i32, i32
  }
  func.func @transform_3(%arg0: i32) -> (i32, i32) {
    %c0_i32 = arith.constant 0 : i32
    %c0_i32_0 = arith.constant 0 : i32
    return %arg0, %c0_i32 : i32, i32
  }
}

</mosaic_0001>

<llo_original>
// kernel: char_rnn_forward.3
$region0: #{char_rnn_forward.3}
  #allocation0 [shape = 'u32[]', space=smem, size = 0x4, offset = 0x4, fixed_abs, tag = 'smem constant byte address 0x4 - core index']
  #allocation1 [shape = 'u32[144,128]{1,0:T(1,128)}', space=vmem, size = 0x12000, scoped, tag = 'internal scratch']
  %s0 = inlined_call_operand.vmem [shape: f32[16,16], index: 0, kind: input, shape index: {}]
  %s1 = inlined_call_operand.hbm [shape: f32[16,32], index: 1, kind: input, shape index: {}]
  %s2 = inlined_call_operand.vmem [shape: f32[1,32], index: 2, kind: input, shape index: {}]
  %s3 = inlined_call_operand.vmem [shape: f32[16,32], index: 3, kind: output, shape index: {}]
  %s4 = sld [smem:[#allocation0]]
  $region26: #{char_rnn_forward.3} parent=0
    _
  %s6 = ssub.s32 1, %s4
  %s7 = scalar_select 0, %s6, %s4
  $region1: #{char_rnn_forward.3} parent=0
    #allocation2 [shape = 'u8[8192]{0}', space=vmem, size = 0x2000, scoped, tag = 'input window, operand 1, single buffered']
    #allocation3 [shape = 's32[1]{0}', space=sflag, size = 0x4, scoped, tag = 'scoped memory for char_rnn_forward.3']
    %8 = vsyncpa [#allocation3], 0
    // Predicated region
    $region2: #{char_rnn_forward.3} parent=1 // pred_check
      _
    $region3: #{char_rnn_forward.3} parent=1 // pred_check_branch
      %10 = sbr.rel (0) target = $region5
    $region4: #{char_rnn_forward.3} parent=1 // pred_region
      _
    $region5: #{char_rnn_forward.3} parent=1 // pred_fallthru
      _
    // Predicated region
    $region6: #{char_rnn_forward.3} parent=1 // pred_check
      _
    $region7: #{char_rnn_forward.3} parent=1 // pred_check_branch
      %12 = sbr.rel (0) target = $region9
    $region8: #{char_rnn_forward.3} parent=1 // pred_region
      %s14 = ssub.s32 256, 256
      %15 = vsyncadd [#allocation3], %s14
      %s16 = sshll.u32 [#allocation2], 4
      %s17 = int_to_ptr.vmem [resolvable:$true] %s16
      %22 = dma.hbm_to_vmem [thread:$0]  %s1, 256, %s17, [#allocation3], 128, 128, 8
    $region9: #{char_rnn_forward.3} parent=1 // pred_fallthru
      _
    // Predicated region
    $region10: #{char_rnn_forward.3} parent=1 // pred_check
      _
    $region11: #{char_rnn_forward.3} parent=1 // pred_check_branch
      %24 = sbr.rel (0) target = $region13
    $region12: #{char_rnn_forward.3} parent=1 // pred_region
      _
    $region13: #{char_rnn_forward.3} parent=1 // pred_fallthru
      _
    // Predicated region
    $region14: #{char_rnn_forward.3} parent=1 // pred_check
      _
    $region15: #{char_rnn_forward.3} parent=1 // pred_check_branch
      %26 = sbr.rel (0) target = $region17
    $region16: #{char_rnn_forward.3} parent=1 // pred_region
      %27 = dma.done [#allocation3], 256
    $region17: #{char_rnn_forward.3} parent=1 // pred_fallthru
      _
    %v28 = vld [vmem:[%s0] sm:$0xff]
    %v29 = vld [vmem:[%s0 + $0x8] sm:$0xff]
    %v30 = vld [vmem:[#allocation2] sm:$0xff]
    %v31 = vld [vmem:[#allocation2 + $0x8] sm:$0xff]
    %v32 = vld [vmem:[%s2] sm:$0x1]
    %v34 = vlaneseq
    %v35 = vshrl.u32 %v34, 7
    %v36 = vsub.s32 0, %v35
    %v37 = vrot.slane %v32, %v36
    %vm39 = vcmask 130048
    %v41 = vsel %vm39, %v28, 0
    %v44 = vsel %vm39, %v29, 0
    %46 = vmatprep.subr.mxu0 0.0
    %47 = vmatpush1.msra.mxu0 %v30
    %48 = vmatprep.subr.mxu0 0.0
    %49 = vmatpush1.msra.mxu0 %v31
    %50 = vmatprep.subr.mxu0 0.0
    %51 = vmatpush1.msra.mxu0 0.0
    %52 = vmatprep.subr.mxu0 0.0
    %53 = vmatpush1.msra.mxu0 0.0
    %54 = vmatprep.subr.mxu0 0.0
    %55 = vmatpush1.msra.mxu0 0.0
    %56 = vmatprep.subr.mxu0 0.0
    %57 = vmatpush1.msra.mxu0 0.0
    %58 = vmatprep.subr.mxu0 0.0
    %59 = vmatpush1.msra.mxu0 0.0
    %60 = vmatprep.subr.mxu0 0.0
    %61 = vmatpush1.msra.mxu0 0.0
    %62 = vmatprep.subr.mxu0 0.0
    %63 = vmatpush1.msra.mxu0 0.0
    %64 = vmatprep.subr.mxu0 0.0
    %65 = vmatpush1.msra.mxu0 0.0
    %66 = vmatprep.subr.mxu0 0.0
    %67 = vmatpush1.msra.mxu0 0.0
    %68 = vmatprep.subr.mxu0 0.0
    %69 = vmatpush1.msra.mxu0 0.0
    %70 = vmatprep.subr.mxu0 0.0
    %71 = vmatpush1.msra.mxu0 0.0
    %72 = vmatprep.subr.mxu0 0.0
    %73 = vmatpush1.msra.mxu0 0.0
    %74 = vmatprep.subr.mxu0 0.0
    %75 = vmatpush1.msra.mxu0 0.0
    %76 = vmatprep.subr.mxu0 0.0
    %77 = vmatpush1.msra.mxu0 0.0
    %78 = vmatprep.subr.mxu0 0.0
    %79 = vmatpush1.msra.mxu0 0.0
    %80 = vmatprep.subr.mxu0 0.0
    %81 = vmatpush1.msra.mxu0 0.0
    %82 = vmatprep.subr.mxu0 0.0
    %83 = vmatpush1.msra.mxu0 0.0
    %84 = vmatprep.subr.mxu0 0.0
    %85 = vmatpush1.msra.mxu0 0.0
    %86 = vmatprep.subr.mxu0 0.0
    %87 = vmatpush1.msra.mxu0 0.0
    %88 = vmatprep.subr.mxu0 0.0
    %89 = vmatpush1.msra.mxu0 0.0
    %90 = vmatprep.subr.mxu0 0.0
    %91 = vmatpush1.msra.mxu0 0.0
    %92 = vmatprep.subr.mxu0 0.0
    %93 = vmatpush1.msra.mxu0 0.0
    %94 = vmatprep.subr.mxu0 0.0
    %95 = vmatpush1.msra.mxu0 0.0
    %96 = vmatprep.subr.mxu0 0.0
    %97 = vmatpush1.msra.mxu0 0.0
    %98 = vmatprep.subr.mxu0 0.0
    %99 = vmatpush1.msra.mxu0 0.0
    %100 = vmatprep.subr.mxu0 0.0
    %101 = vmatpush1.msra.mxu0 0.0
    %102 = vmatprep.subr.mxu0 0.0
    %103 = vmatpush1.msra.mxu0 0.0
    %104 = vmatprep.subr.mxu0 0.0
    %105 = vmatpush1.msra.mxu0 0.0
    %106 = vmatprep.subr.mxu0 0.0
    %107 = vmatpush1.msra.mxu0 0.0
    %108 = vmatprep.subr.mxu0 0.0
    %109 = vmatpush1.msra.mxu0 0.0
    %110 = vmatprep.mubr.f32.mxu0 0.0
    %111 = vmatmul.mubr.f32.gmra.mrb[0].mxu0 %v41
    %v112 = vpop.f32.mrb[0].mxu0
    %v113 = vadd.f32 %v37, %v112
    %v114 = vpop.f32.mrb[0].mxu0
    %115 = vmatprep.mubr.f32.mxu0 0.0
    %116 = vmatmul.mubr.f32.gmra.mrb[0].mxu0 %v44
    %v117 = vpop.f32.mrb[0].mxu0
    %v118 = vadd.f32 %v37, %v117
    %v119 = vpop.f32.mrb[0].mxu0
    %120 = vdwg.mxu0
    %vm121 = vcmask 261120
    %122 = vst.msk [vmem:[%s3] sm:$0xff] %vm121, %v113
    %123 = vst.msk [vmem:[%s3 + $0x8] sm:$0xff] %vm121, %v118
    // Predicated region
    $region18: #{char_rnn_forward.3} parent=1 // pred_check
      _
    $region19: #{char_rnn_forward.3} parent=1 // pred_check_branch
      %125 = sbr.rel (0) target = $region21
    $region20: #{char_rnn_forward.3} parent=1 // pred_region
      _
    $region21: #{char_rnn_forward.3} parent=1 // pred_fallthru
      _
    // Predicated region
    $region22: #{char_rnn_forward.3} parent=1 // pred_check
      _
    $region23: #{char_rnn_forward.3} parent=1 // pred_check_branch
      %127 = sbr.rel (0) target = $region25
    $region24: #{char_rnn_forward.3} parent=1 // pred_region
      _
    $region25: #{char_rnn_forward.3} parent=1 // pred_fallthru
      _
    %128 = vsyncpa [#allocation3], 1

// kernel: char_rnn_forward.5
$region0: #{char_rnn_forward.5}
  #allocation0 [shape = 'u32[]', space=smem, size = 0x4, offset = 0x4, fixed_abs, tag = 'smem constant byte address 0x4 - core index']
  #allocation1 [shape = 'u32[144,128]{1,0:T(1,128)}', space=vmem, size = 0x12000, scoped, tag = 'internal scratch']
  %s0 = inlined_call_operand.vmem [shape: f32[16,32], index: 0, kind: input, shape index: {}]
  %s1 = inlined_call_operand.vmem [shape: f32[32,16], index: 1, kind: input, shape index: {}]
  %s2 = inlined_call_operand.vmem [shape: f32[1,16], index: 2, kind: input, shape index: {}]
  %s3 = inlined_call_operand.hbm [shape: f32[16,16], index: 3, kind: output, shape index: {}]
  %s4 = sld [smem:[#allocation0]]
  $region22: #{char_rnn_forward.5} parent=0
    _
  %s6 = ssub.s32 1, %s4
  %s7 = scalar_select 0, %s6, %s4
  $region1: #{char_rnn_forward.5} parent=0
    #allocation2 [shape = 'u8[8192]{0}', space=vmem, size = 0x2000, scoped, tag = 'output window, operand 0, single buffered']
    #allocation3 [shape = 's32[1]{0}', space=sflag, size = 0x4, scoped, tag = 'scoped memory for char_rnn_forward.5']
    %8 = vsyncpa [#allocation3], 0
    // Predicated region
    $region2: #{char_rnn_forward.5} parent=1 // pred_check
      _
    $region3: #{char_rnn_forward.5} parent=1 // pred_check_branch
      %10 = sbr.rel (0) target = $region5
    $region4: #{char_rnn_forward.5} parent=1 // pred_region
      _
    $region5: #{char_rnn_forward.5} parent=1 // pred_fallthru
      _
    // Predicated region
    $region6: #{char_rnn_forward.5} parent=1 // pred_check
      _
    $region7: #{char_rnn_forward.5} parent=1 // pred_check_branch
      %12 = sbr.rel (0) target = $region9
    $region8: #{char_rnn_forward.5} parent=1 // pred_region
      _
    $region9: #{char_rnn_forward.5} parent=1 // pred_fallthru
      _
    // Predicated region
    $region10: #{char_rnn_forward.5} parent=1 // pred_check
      _
    $region11: #{char_rnn_forward.5} parent=1 // pred_check_branch
      %14 = sbr.rel (0) target = $region13
    $region12: #{char_rnn_forward.5} parent=1 // pred_region
      _
    $region13: #{char_rnn_forward.5} parent=1 // pred_fallthru
      _
    %v15 = vld [vmem:[%s0] sm:$0xff]
    %v16 = vld [vmem:[%s0 + $0x8] sm:$0xff]
    %v17 = vld [vmem:[%s1] sm:$0xff]
    %v18 = vld [vmem:[%s1 + $0x8] sm:$0xff]
    %v19 = vld [vmem:[%s1 + $0x10] sm:$0xff]
    %v20 = vld [vmem:[%s1 + $0x18] sm:$0xff]
    %v21 = vld [vmem:[%s2] sm:$0x1]
    %v23 = vlaneseq
    %v24 = vshrl.u32 %v23, 7
    %v25 = vsub.s32 0, %v24
    %v26 = vrot.slane %v21, %v25
    %vm28 = vcmask 261120
    %v30 = vsel %vm28, %v15, 0
    %v33 = vsel %vm28, %v16, 0
    %35 = vmatprep.subr.mxu0 0.0
    %36 = vmatpush1.msra.mxu0 %v17
    %37 = vmatprep.subr.mxu0 0.0
    %38 = vmatpush1.msra.mxu0 %v18
    %39 = vmatprep.subr.mxu0 0.0
    %40 = vmatpush1.msra.mxu0 %v19
    %41 = vmatprep.subr.mxu0 0.0
    %42 = vmatpush1.msra.mxu0 %v20
    %43 = vmatprep.subr.mxu0 0.0
    %44 = vmatpush1.msra.mxu0 0.0
    %45 = vmatprep.subr.mxu0 0.0
    %46 = vmatpush1.msra.mxu0 0.0
    %47 = vmatprep.subr.mxu0 0.0
    %48 = vmatpush1.msra.mxu0 0.0
    %49 = vmatprep.subr.mxu0 0.0
    %50 = vmatpush1.msra.mxu0 0.0
    %51 = vmatprep.subr.mxu0 0.0
    %52 = vmatpush1.msra.mxu0 0.0
    %53 = vmatprep.subr.mxu0 0.0
    %54 = vmatpush1.msra.mxu0 0.0
    %55 = vmatprep.subr.mxu0 0.0
    %56 = vmatpush1.msra.mxu0 0.0
    %57 = vmatprep.subr.mxu0 0.0
    %58 = vmatpush1.msra.mxu0 0.0
    %59 = vmatprep.subr.mxu0 0.0
    %60 = vmatpush1.msra.mxu0 0.0
    %61 = vmatprep.subr.mxu0 0.0
    %62 = vmatpush1.msra.mxu0 0.0
    %63 = vmatprep.subr.mxu0 0.0
    %64 = vmatpush1.msra.mxu0 0.0
    %65 = vmatprep.subr.mxu0 0.0
    %66 = vmatpush1.msra.mxu0 0.0
    %67 = vmatprep.subr.mxu0 0.0
    %68 = vmatpush1.msra.mxu0 0.0
    %69 = vmatprep.subr.mxu0 0.0
    %70 = vmatpush1.msra.mxu0 0.0
    %71 = vmatprep.subr.mxu0 0.0
    %72 = vmatpush1.msra.mxu0 0.0
    %73 = vmatprep.subr.mxu0 0.0
    %74 = vmatpush1.msra.mxu0 0.0
    %75 = vmatprep.subr.mxu0 0.0
    %76 = vmatpush1.msra.mxu0 0.0
    %77 = vmatprep.subr.mxu0 0.0
    %78 = vmatpush1.msra.mxu0 0.0
    %79 = vmatprep.subr.mxu0 0.0
    %80 = vmatpush1.msra.mxu0 0.0
    %81 = vmatprep.subr.mxu0 0.0
    %82 = vmatpush1.msra.mxu0 0.0
    %83 = vmatprep.subr.mxu0 0.0
    %84 = vmatpush1.msra.mxu0 0.0
    %85 = vmatprep.subr.mxu0 0.0
    %86 = vmatpush1.msra.mxu0 0.0
    %87 = vmatprep.subr.mxu0 0.0
    %88 = vmatpush1.msra.mxu0 0.0
    %89 = vmatprep.subr.mxu0 0.0
    %90 = vmatpush1.msra.mxu0 0.0
    %91 = vmatprep.subr.mxu0 0.0
    %92 = vmatpush1.msra.mxu0 0.0
    %93 = vmatprep.subr.mxu0 0.0
    %94 = vmatpush1.msra.mxu0 0.0
    %95 = vmatprep.subr.mxu0 0.0
    %96 = vmatpush1.msra.mxu0 0.0
    %97 = vmatprep.subr.mxu0 0.0
    %98 = vmatpush1.msra.mxu0 0.0
    %99 = vmatprep.mubr.f32.mxu0 0.0
    %100 = vmatmul.mubr.f32.gmra.mrb[0].mxu0 %v30
    %v101 = vpop.f32.mrb[0].mxu0
    %v102 = vadd.f32 %v26, %v101
    %v103 = vpop.f32.mrb[0].mxu0
    %104 = vmatprep.mubr.f32.mxu0 0.0
    %105 = vmatmul.mubr.f32.gmra.mrb[0].mxu0 %v33
    %v106 = vpop.f32.mrb[0].mxu0
    %v107 = vadd.f32 %v26, %v106
    %v108 = vpop.f32.mrb[0].mxu0
    %109 = vdwg.mxu0
    %vm110 = vcmask 130048
    %111 = vst.msk [vmem:[#allocation2] sm:$0xff] %vm110, %v102
    %112 = vst.msk [vmem:[#allocation2 + $0x8] sm:$0xff] %vm110, %v107
    // Predicated region
    $region14: #{char_rnn_forward.5} parent=1 // pred_check
      _
    $region15: #{char_rnn_forward.5} parent=1 // pred_check_branch
      %114 = sbr.rel (0) target = $region17
    $region16: #{char_rnn_forward.5} parent=1 // pred_region
      %s116 = ssub.s32 256, 256
      %117 = vsyncadd [#allocation3], %s116
      %s118 = sshll.u32 [#allocation2], 4
      %s119 = int_to_ptr.vmem [resolvable:$true] %s118
      %124 = dma.vmem_to_hbm [thread:$0]  %s119, 256, %s3, [#allocation3], 128, 128, 8
    $region17: #{char_rnn_forward.5} parent=1 // pred_fallthru
      _
    // Predicated region
    $region18: #{char_rnn_forward.5} parent=1 // pred_check
      _
    $region19: #{char_rnn_forward.5} parent=1 // pred_check_branch
      %126 = sbr.rel (0) target = $region21
    $region20: #{char_rnn_forward.5} parent=1 // pred_region
      %127 = dma.done [#allocation3], 256
    $region21: #{char_rnn_forward.5} parent=1 // pred_fallthru
      _
    %128 = vsyncpa [#allocation3], 1

// kernel: char_rnn_forward.4
$region0: #{char_rnn_forward.4}
  #allocation0 [shape = 'u32[]', space=smem, size = 0x4, offset = 0x4, fixed_abs, tag = 'smem constant byte address 0x4 - core index']
  #allocation1 [shape = 'u32[144,128]{1,0:T(1,128)}', space=vmem, size = 0x12000, scoped, tag = 'internal scratch']
  %s0 = inlined_call_operand.vmem [shape: f32[2,8,32], index: 0, kind: input, shape index: {}]
  %s1 = inlined_call_operand.vmem [shape: f32[2,32], index: 1, kind: input, shape index: {}]
  %s2 = inlined_call_operand.vmem [shape: f32[32,32], index: 2, kind: input, shape index: {}]
  %s3 = inlined_call_operand.vmem [shape: f32[2,8,32], index: 3, kind: output, shape index: {0}]
  %s4 = inlined_call_operand.hbm [shape: f32[2,32], index: 4, kind: output, shape index: {1}]
  %5 = xla_tuple %s3, %s4
  %s6 = sld [smem:[#allocation0]]
  $region34: #{char_rnn_forward.4} parent=0
    _
  %s8 = ssub.s32 1, %s6
  %s9 = scalar_select 0, %s8, %s6
  $region1: #{char_rnn_forward.4} parent=0
    #allocation2 [shape = 'u8[1024]{0}', space=vmem, size = 0x400, scoped, tag = 'output window, operand 1, single buffered']
    #allocation3 [shape = 's32[1]{0}', space=sflag, size = 0x4, scoped, tag = 'scoped memory for char_rnn_forward.4']
    %10 = vsyncpa [#allocation3], 0
    // Predicated region
    $region2: #{char_rnn_forward.4} parent=1 // pred_check
      _
    $region3: #{char_rnn_forward.4} parent=1 // pred_check_branch
      %12 = sbr.rel (0) target = $region5
    $region4: #{char_rnn_forward.4} parent=1 // pred_region
      _
    $region5: #{char_rnn_forward.4} parent=1 // pred_fallthru
      _
    // Predicated region
    $region6: #{char_rnn_forward.4} parent=1 // pred_check
      _
    $region7: #{char_rnn_forward.4} parent=1 // pred_check_branch
      %14 = sbr.rel (0) target = $region9
    $region8: #{char_rnn_forward.4} parent=1 // pred_region
      _
    $region9: #{char_rnn_forward.4} parent=1 // pred_fallthru
      _
    // Predicated region
    $region10: #{char_rnn_forward.4} parent=1 // pred_check
      _
    $region11: #{char_rnn_forward.4} parent=1 // pred_check_branch
      %16 = sbr.rel (0) target = $region13
    $region12: #{char_rnn_forward.4} parent=1 // pred_region
      _
    $region13: #{char_rnn_forward.4} parent=1 // pred_fallthru
      _
    %p17 = scmp.eq.s32.totalorder 0, 0
    // Predicated region
    $region14: #{char_rnn_forward.4} parent=1 // pred_check
      %p18 = pneg %p17
    $region15: #{char_rnn_forward.4} parent=1 // pred_check_branch
      %20 = sbr.rel (%p18) target = $region17
    $region16: #{char_rnn_forward.4} parent=1 // pred_region
      %v21 = vld [vmem:[%s1] sm:$0x3]
      %vm22 = vcmask 254976
      %23 = vst.msk [vmem:[#allocation2] sm:$0x3] %vm22, %v21
    $region17: #{char_rnn_forward.4} parent=1 // pred_fallthru
      _
    %v24 = vld [vmem:[%s2] sm:$0xff]
    %v25 = vld [vmem:[%s2 + $0x8] sm:$0xff]
    %v26 = vld [vmem:[%s2 + $0x10] sm:$0xff]
    %v27 = vld [vmem:[%s2 + $0x18] sm:$0xff]
    %v28 = vld [vmem:[#allocation2] sm:$0x3]
    %v29 = vld [vmem:[%s0] sm:$0x1]
    %v30 = vld [vmem:[%s0 + $0x8] sm:$0x1]
    %vm31 = vcmask 261120
    %v33 = vsel %vm31, %v28, 0
    %35 = vmatprep.subr.mxu0 0.0
    %36 = vmatpush1.msra.mxu0 %v24
    %37 = vmatprep.subr.mxu0 0.0
    %38 = vmatpush1.msra.mxu0 %v25
    %39 = vmatprep.subr.mxu0 0.0
    %40 = vmatpush1.msra.mxu0 %v26
    %41 = vmatprep.subr.mxu0 0.0
    %42 = vmatpush1.msra.mxu0 %v27
    %43 = vmatprep.subr.mxu0 0.0
    %44 = vmatpush1.msra.mxu0 0.0
    %45 = vmatprep.subr.mxu0 0.0
    %46 = vmatpush1.msra.mxu0 0.0
    %47 = vmatprep.subr.mxu0 0.0
    %48 = vmatpush1.msra.mxu0 0.0
    %49 = vmatprep.subr.mxu0 0.0
    %50 = vmatpush1.msra.mxu0 0.0
    %51 = vmatprep.subr.mxu0 0.0
    %52 = vmatpush1.msra.mxu0 0.0
    %53 = vmatprep.subr.mxu0 0.0
    %54 = vmatpush1.msra.mxu0 0.0
    %55 = vmatprep.subr.mxu0 0.0
    %56 = vmatpush1.msra.mxu0 0.0
    %57 = vmatprep.subr.mxu0 0.0
    %58 = vmatpush1.msra.mxu0 0.0
    %59 = vmatprep.subr.mxu0 0.0
    %60 = vmatpush1.msra.mxu0 0.0
    %61 = vmatprep.subr.mxu0 0.0
    %62 = vmatpush1.msra.mxu0 0.0
    %63 = vmatprep.subr.mxu0 0.0
    %64 = vmatpush1.msra.mxu0 0.0
    %65 = vmatprep.subr.mxu0 0.0
    %66 = vmatpush1.msra.mxu0 0.0
    %67 = vmatprep.subr.mxu0 0.0
    %68 = vmatpush1.msra.mxu0 0.0
    %69 = vmatprep.subr.mxu0 0.0
    %70 = vmatpush1.msra.mxu0 0.0
    %71 = vmatprep.subr.mxu0 0.0
    %72 = vmatpush1.msra.mxu0 0.0
    %73 = vmatprep.subr.mxu0 0.0
    %74 = vmatpush1.msra.mxu0 0.0
    %75 = vmatprep.subr.mxu0 0.0
    %76 = vmatpush1.msra.mxu0 0.0
    %77 = vmatprep.subr.mxu0 0.0
    %78 = vmatpush1.msra.mxu0 0.0
    %79 = vmatprep.subr.mxu0 0.0
    %80 = vmatpush1.msra.mxu0 0.0
    %81 = vmatprep.subr.mxu0 0.0
    %82 = vmatpush1.msra.mxu0 0.0
    %83 = vmatprep.subr.mxu0 0.0
    %84 = vmatpush1.msra.mxu0 0.0
    %85 = vmatprep.subr.mxu0 0.0
    %86 = vmatpush1.msra.mxu0 0.0
    %87 = vmatprep.subr.mxu0 0.0
    %88 = vmatpush1.msra.mxu0 0.0
    %89 = vmatprep.subr.mxu0 0.0
    %90 = vmatpush1.msra.mxu0 0.0
    %91 = vmatprep.subr.mxu0 0.0
    %92 = vmatpush1.msra.mxu0 0.0
    %93 = vmatprep.subr.mxu0 0.0
    %94 = vmatpush1.msra.mxu0 0.0
    %95 = vmatprep.subr.mxu0 0.0
    %96 = vmatpush1.msra.mxu0 0.0
    %97 = vmatprep.subr.mxu0 0.0
    %98 = vmatpush1.msra.mxu0 0.0
    %99 = vmatprep.mubr.f32.mxu0 0.0
    %100 = vmatmul.mubr.f32.gmra.mrb[0].mxu0 %v33
    %v101 = vpop.f32.mrb[0].mxu0
    %v102 = vadd.f32 0.0, %v101
    %v103 = vpop.f32.mrb[0].mxu0
    %104 = vdwg.mxu0
    %v106 = vrot.slane %v102, 1
    %v109 = vadd.f32 %v29, %v102
    %v110 = vadd.f32 %v30, %v106
    %v111 = vtanh.pop %v109
    %v112 = vtanh.pop %v110
    %vm113 = vcmask 253952
    %114 = vst.msk [vmem:[%s3] sm:$0x1] %vm113, %v111
    %115 = vst.msk [vmem:[%s3 + $0x8] sm:$0x1] %vm113, %v112
    %v116 = vld [vmem:[%s0 + $0x1] sm:$0x1]
    %v117 = vld [vmem:[%s0 + $0x9] sm:$0x1]
    %v120 = vrot.slane %v112, 7
    %vm121 = vcmask 1041409
    %v122 = vsel %vm121, %v120, %v111
    %v123 = vsel %vm31, %v122, 0
    %125 = vmatprep.subr.mxu0 0.0
    %126 = vmatpush1.msra.mxu0 %v24
    %127 = vmatprep.subr.mxu0 0.0
    %128 = vmatpush1.msra.mxu0 %v25
    %129 = vmatprep.subr.mxu0 0.0
    %130 = vmatpush1.msra.mxu0 %v26
    %131 = vmatprep.subr.mxu0 0.0
    %132 = vmatpush1.msra.mxu0 %v27
    %133 = vmatprep.subr.mxu0 0.0
    %134 = vmatpush1.msra.mxu0 0.0
    %135 = vmatprep.subr.mxu0 0.0
    %136 = vmatpush1.msra.mxu0 0.0
    %137 = vmatprep.subr.mxu0 0.0
    %138 = vmatpush1.msra.mxu0 0.0
    %139 = vmatprep.subr.mxu0 0.0
    %140 = vmatpush1.msra.mxu0 0.0
    %141 = vmatprep.subr.mxu0 0.0
    %142 = vmatpush1.msra.mxu0 0.0
    %143 = vmatprep.subr.mxu0 0.0
    %144 = vmatpush1.msra.mxu0 0.0
    %145 = vmatprep.subr.mxu0 0.0
    %146 = vmatpush1.msra.mxu0 0.0
    %147 = vmatprep.subr.mxu0 0.0
    %148 = vmatpush1.msra.mxu0 0.0
    %149 = vmatprep.subr.mxu0 0.0
    %150 = vmatpush1.msra.mxu0 0.0
    %151 = vmatprep.subr.mxu0 0.0
    %152 = vmatpush1.msra.mxu0 0.0
    %153 = vmatprep.subr.mxu0 0.0
    %154 = vmatpush1.msra.mxu0 0.0
    %155 = vmatprep.subr.mxu0 0.0
    %156 = vmatpush1.msra.mxu0 0.0
    %157 = vmatprep.subr.mxu0 0.0
    %158 = vmatpush1.msra.mxu0 0.0
    %159 = vmatprep.subr.mxu0 0.0
    %160 = vmatpush1.msra.mxu0 0.0
    %161 = vmatprep.subr.mxu0 0.0
    %162 = vmatpush1.msra.mxu0 0.0
    %163 = vmatprep.subr.mxu0 0.0
    %164 = vmatpush1.msra.mxu0 0.0
    %165 = vmatprep.subr.mxu0 0.0
    %166 = vmatpush1.msra.mxu0 0.0
    %167 = vmatprep.subr.mxu0 0.0
    %168 = vmatpush1.msra.mxu0 0.0
    %169 = vmatprep.subr.mxu0 0.0
    %170 = vmatpush1.msra.mxu0 0.0
    %171 = vmatprep.subr.mxu0 0.0
    %172 = vmatpush1.msra.mxu0 0.0
    %173 = vmatprep.subr.mxu0 0.0
    %174 = vmatpush1.msra.mxu0 0.0
    %175 = vmatprep.subr.mxu0 0.0
    %176 = vmatpush1.msra.mxu0 0.0
    %177 = vmatprep.subr.mxu0 0.0
    %178 = vmatpush1.msra.mxu0 0.0
    %179 = vmatprep.subr.mxu0 0.0
    %180 = vmatpush1.msra.mxu0 0.0
    %181 = vmatprep.subr.mxu0 0.0
    %182 = vmatpush1.msra.mxu0 0.0
    %183 = vmatprep.subr.mxu0 0.0
    %184 = vmatpush1.msra.mxu0 0.0
    %185 = vmatprep.subr.mxu0 0.0
    %186 = vmatpush1.msra.mxu0 0.0
    %187 = vmatprep.subr.mxu0 0.0
    %188 = vmatpush1.msra.mxu0 0.0
    %189 = vmatprep.mubr.f32.mxu0 0.0
    %190 = vmatmul.mubr.f32.gmra.mrb[0].mxu0 %v123
    %v191 = vpop.f32.mrb[0].mxu0
    %v192 = vadd.f32 0.0, %v191
    %v193 = vpop.f32.mrb[0].mxu0
    %194 = vdwg.mxu0
    %v196 = vrot.slane %v192, 1
    %v199 = vadd.f32 %v116, %v192
    %v200 = vadd.f32 %v117, %v196
    %v201 = vtanh.pop %v199
    %v202 = vtanh.pop %v200
    %203 = vst.msk [vmem:[%s3 + $0x1] sm:$0x1] %vm113, %v201
    %204 = vst.msk [vmem:[%s3 + $0x9] sm:$0x1] %vm113, %v202
    %v205 = vld [vmem:[%s0 + $0x2] sm:$0x1]
    %v206 = vld [vmem:[%s0 + $0xa] sm:$0x1]
    %v209 = vrot.slane %v202, 7
    %v210 = vsel %vm121, %v209, %v201
    %v211 = vsel %vm31, %v210, 0
    %213 = vmatprep.subr.mxu0 0.0
    %214 = vmatpush1.msra.mxu0 %v24
    %215 = vmatprep.subr.mxu0 0.0
    %216 = vmatpush1.msra.mxu0 %v25
    %217 = vmatprep.subr.mxu0 0.0
    %218 = vmatpush1.msra.mxu0 %v26
    %219 = vmatprep.subr.mxu0 0.0
    %220 = vmatpush1.msra.mxu0 %v27
    %221 = vmatprep.subr.mxu0 0.0
    %222 = vmatpush1.msra.mxu0 0.0
    %223 = vmatprep.subr.mxu0 0.0
    %224 = vmatpush1.msra.mxu0 0.0
    %225 = vmatprep.subr.mxu0 0.0
    %226 = vmatpush1.msra.mxu0 0.0
    %227 = vmatprep.subr.mxu0 0.0
    %228 = vmatpush1.msra.mxu0 0.0
    %229 = vmatprep.subr.mxu0 0.0
    %230 = vmatpush1.msra.mxu0 0.0
    %231 = vmatprep.subr.mxu0 0.0
    %232 = vmatpush1.msra.mxu0 0.0
    %233 = vmatprep.subr.mxu0 0.0
    %234 = vmatpush1.msra.mxu0 0.0
    %235 = vmatprep.subr.mxu0 0.0
    %236 = vmatpush1.msra.mxu0 0.0
    %237 = vmatprep.subr.mxu0 0.0
    %238 = vmatpush1.msra.mxu0 0.0
    %239 = vmatprep.subr.mxu0 0.0
    %240 = vmatpush1.msra.mxu0 0.0
    %241 = vmatprep.subr.mxu0 0.0
    %242 = vmatpush1.msra.mxu0 0.0
    %243 = vmatprep.subr.mxu0 0.0
    %244 = vmatpush1.msra.mxu0 0.0
    %245 = vmatprep.subr.mxu0 0.0
    %246 = vmatpush1.msra.mxu0 0.0
    %247 = vmatprep.subr.mxu0 0.0
    %248 = vmatpush1.msra.mxu0 0.0
    %249 = vmatprep.subr.mxu0 0.0
    %250 = vmatpush1.msra.mxu0 0.0
    %251 = vmatprep.subr.mxu0 0.0
    %252 = vmatpush1.msra.mxu0 0.0
    %253 = vmatprep.subr.mxu0 0.0
    %254 = vmatpush1.msra.mxu0 0.0
    %255 = vmatprep.subr.mxu0 0.0
    %256 = vmatpush1.msra.mxu0 0.0
    %257 = vmatprep.subr.mxu0 0.0
    %258 = vmatpush1.msra.mxu0 0.0
    %259 = vmatprep.subr.mxu0 0.0
    %260 = vmatpush1.msra.mxu0 0.0
    %261 = vmatprep.subr.mxu0 0.0
    %262 = vmatpush1.msra.mxu0 0.0
    %263 = vmatprep.subr.mxu0 0.0
    %264 = vmatpush1.msra.mxu0 0.0
    %265 = vmatprep.subr.mxu0 0.0
    %266 = vmatpush1.msra.mxu0 0.0
    %267 = vmatprep.subr.mxu0 0.0
    %268 = vmatpush1.msra.mxu0 0.0
    %269 = vmatprep.subr.mxu0 0.0
    %270 = vmatpush1.msra.mxu0 0.0
    %271 = vmatprep.subr.mxu0 0.0
    %272 = vmatpush1.msra.mxu0 0.0
    %273 = vmatprep.subr.mxu0 0.0
    %274 = vmatpush1.msra.mxu0 0.0
    %275 = vmatprep.subr.mxu0 0.0
    %276 = vmatpush1.msra.mxu0 0.0
    %277 = vmatprep.mubr.f32.mxu0 0.0
    %278 = vmatmul.mubr.f32.gmra.mrb[0].mxu0 %v211
    %v279 = vpop.f32.mrb[0].mxu0
    %v280 = vadd.f32 0.0, %v279
    %v281 = vpop.f32.mrb[0].mxu0
    %282 = vdwg.mxu0
    %v284 = vrot.slane %v280, 1
    %v287 = vadd.f32 %v205, %v280
    %v288 = vadd.f32 %v206, %v284
    %v289 = vtanh.pop %v287
    %v290 = vtanh.pop %v288
    %291 = vst.msk [vmem:[%s3 + $0x2] sm:$0x1] %vm113, %v289
    %292 = vst.msk [vmem:[%s3 + $0xa] sm:$0x1] %vm113, %v290
    %v293 = vld [vmem:[%s0 + $0x3] sm:$0x1]
    %v294 = vld [vmem:[%s0 + $0xb] sm:$0x1]
    %v297 = vrot.slane %v290, 7
    %v298 = vsel %vm121, %v297, %v289
    %v299 = vsel %vm31, %v298, 0
    %301 = vmatprep.subr.mxu0 0.0
    %302 = vmatpush1.msra.mxu0 %v24
    %303 = vmatprep.subr.mxu0 0.0
    %304 = vmatpush1.msra.mxu0 %v25
    %305 = vmatprep.subr.mxu0 0.0
    %306 = vmatpush1.msra.mxu0 %v26
    %307 = vmatprep.subr.mxu0 0.0
    %308 = vmatpush1.msra.mxu0 %v27
    %309 = vmatprep.subr.mxu0 0.0
    %310 = vmatpush1.msra.mxu0 0.0
    %311 = vmatprep.subr.mxu0 0.0
    %312 = vmatpush1.msra.mxu0 0.0
    %313 = vmatprep.subr.mxu0 0.0
    %314 = vmatpush1.msra.mxu0 0.0
    %315 = vmatprep.subr.mxu0 0.0
    %316 = vmatpush1.msra.mxu0 0.0
    %317 = vmatprep.subr.mxu0 0.0
    %318 = vmatpush1.msra.mxu0 0.0
    %319 = vmatprep.subr.mxu0 0.0
    %320 = vmatpush1.msra.mxu0 0.0
    %321 = vmatprep.subr.mxu0 0.0
    %322 = vmatpush1.msra.mxu0 0.0
    %323 = vmatprep.subr.mxu0 0.0
    %324 = vmatpush1.msra.mxu0 0.0
    %325 = vmatprep.subr.mxu0 0.0
    %326 = vmatpush1.msra.mxu0 0.0
    %327 = vmatprep.subr.mxu0 0.0
    %328 = vmatpush1.msra.mxu0 0.0
    %329 = vmatprep.subr.mxu0 0.0
    %330 = vmatpush1.msra.mxu0 0.0
    %331 = vmatprep.subr.mxu0 0.0
    %332 = vmatpush1.msra.mxu0 0.0
    %333 = vmatprep.subr.mxu0 0.0
    %334 = vmatpush1.msra.mxu0 0.0
    %335 = vmatprep.subr.mxu0 0.0
    %336 = vmatpush1.msra.mxu0 0.0
    %337 = vmatprep.subr.mxu0 0.0
    %338 = vmatpush1.msra.mxu0 0.0
    %339 = vmatprep.subr.mxu0 0.0
    %340 = vmatpush1.msra.mxu0 0.0
    %341 = vmatprep.subr.mxu0 0.0
    %342 = vmatpush1.msra.mxu0 0.0
    %343 = vmatprep.subr.mxu0 0.0
    %344 = vmatpush1.msra.mxu0 0.0
    %345 = vmatprep.subr.mxu0 0.0
    %346 = vmatpush1.msra.mxu0 0.0
    %347 = vmatprep.subr.mxu0 0.0
    %348 = vmatpush1.msra.mxu0 0.0
    %349 = vmatprep.subr.mxu0 0.0
    %350 = vmatpush1.msra.mxu0 0.0
    %351 = vmatprep.subr.mxu0 0.0
    %352 = vmatpush1.msra.mxu0 0.0
    %353 = vmatprep.subr.mxu0 0.0
    %354 = vmatpush1.msra.mxu0 0.0
    %355 = vmatprep.subr.mxu0 0.0
    %356 = vmatpush1.msra.mxu0 0.0
    %357 = vmatprep.subr.mxu0 0.0
    %358 = vmatpush1.msra.mxu0 0.0
    %359 = vmatprep.subr.mxu0 0.0
    %360 = vmatpush1.msra.mxu0 0.0
    %361 = vmatprep.subr.mxu0 0.0
    %362 = vmatpush1.msra.mxu0 0.0
    %363 = vmatprep.subr.mxu0 0.0
    %364 = vmatpush1.msra.mxu0 0.0
    %365 = vmatprep.mubr.f32.mxu0 0.0
    %366 = vmatmul.mubr.f32.gmra.mrb[0].mxu0 %v299
    %v367 = vpop.f32.mrb[0].mxu0
    %v368 = vadd.f32 0.0, %v367
    %v369 = vpop.f32.mrb[0].mxu0
    %370 = vdwg.mxu0
    %v372 = vrot.slane %v368, 1
    %v375 = vadd.f32 %v293, %v368
    %v376 = vadd.f32 %v294, %v372
    %v377 = vtanh.pop %v375
    %v378 = vtanh.pop %v376
    %379 = vst.msk [vmem:[%s3 + $0x3] sm:$0x1] %vm113, %v377
    %380 = vst.msk [vmem:[%s3 + $0xb] sm:$0x1] %vm113, %v378
    %v381 = vld [vmem:[%s0 + $0x4] sm:$0x1]
    %v382 = vld [vmem:[%s0 + $0xc] sm:$0x1]
    %v385 = vrot.slane %v378, 7
    %v386 = vsel %vm121, %v385, %v377
    %v387 = vsel %vm31, %v386, 0
    %389 = vmatprep.subr.mxu0 0.0
    %390 = vmatpush1.msra.mxu0 %v24
    %391 = vmatprep.subr.mxu0 0.0
    %392 = vmatpush1.msra.mxu0 %v25
    %393 = vmatprep.subr.mxu0 0.0
    %394 = vmatpush1.msra.mxu0 %v26
    %395 = vmatprep.subr.mxu0 0.0
    %396 = vmatpush1.msra.mxu0 %v27
    %397 = vmatprep.subr.mxu0 0.0
    %398 = vmatpush1.msra.mxu0 0.0
    %399 = vmatprep.subr.mxu0 0.0
    %400 = vmatpush1.msra.mxu0 0.0
    %401 = vmatprep.subr.mxu0 0.0
    %402 = vmatpush1.msra.mxu0 0.0
    %403 = vmatprep.subr.mxu0 0.0
    %404 = vmatpush1.msra.mxu0 0.0
    %405 = vmatprep.subr.mxu0 0.0
    %406 = vmatpush1.msra.mxu0 0.0
    %407 = vmatprep.subr.mxu0 0.0
    %408 = vmatpush1.msra.mxu0 0.0
    %409 = vmatprep.subr.mxu0 0.0
    %410 = vmatpush1.msra.mxu0 0.0
    %411 = vmatprep.subr.mxu0 0.0
    %412 = vmatpush1.msra.mxu0 0.0
    %413 = vmatprep.subr.mxu0 0.0
    %414 = vmatpush1.msra.mxu0 0.0
    %415 = vmatprep.subr.mxu0 0.0
    %416 = vmatpush1.msra.mxu0 0.0
    %417 = vmatprep.subr.mxu0 0.0
    %418 = vmatpush1.msra.mxu0 0.0
    %419 = vmatprep.subr.mxu0 0.0
    %420 = vmatpush1.msra.mxu0 0.0
    %421 = vmatprep.subr.mxu0 0.0
    %422 = vmatpush1.msra.mxu0 0.0
    %423 = vmatprep.subr.mxu0 0.0
    %424 = vmatpush1.msra.mxu0 0.0
    %425 = vmatprep.subr.mxu0 0.0
    %426 = vmatpush1.msra.mxu0 0.0
    %427 = vmatprep.subr.mxu0 0.0
    %428 = vmatpush1.msra.mxu0 0.0
    %429 = vmatprep.subr.mxu0 0.0
    %430 = vmatpush1.msra.mxu0 0.0
    %431 = vmatprep.subr.mxu0 0.0
    %432 = vmatpush1.msra.mxu0 0.0
    %433 = vmatprep.subr.mxu0 0.0
    %434 = vmatpush1.msra.mxu0 0.0
    %435 = vmatprep.subr.mxu0 0.0
    %436 = vmatpush1.msra.mxu0 0.0
    %437 = vmatprep.subr.mxu0 0.0
    %438 = vmatpush1.msra.mxu0 0.0
    %439 = vmatprep.subr.mxu0 0.0
    %440 = vmatpush1.msra.mxu0 0.0
    %441 = vmatprep.subr.mxu0 0.0
    %442 = vmatpush1.msra.mxu0 0.0
    %443 = vmatprep.subr.mxu0 0.0
    %444 = vmatpush1.msra.mxu0 0.0
    %445 = vmatprep.subr.mxu0 0.0
    %446 = vmatpush1.msra.mxu0 0.0
    %447 = vmatprep.subr.mxu0 0.0
    %448 = vmatpush1.msra.mxu0 0.0
    %449 = vmatprep.subr.mxu0 0.0
    %450 = vmatpush1.msra.mxu0 0.0
    %451 = vmatprep.subr.mxu0 0.0
    %452 = vmatpush1.msra.mxu0 0.0
    %453 = vmatprep.mubr.f32.mxu0 0.0
    %454 = vmatmul.mubr.f32.gmra.mrb[0].mxu0 %v387
    %v455 = vpop.f32.mrb[0].mxu0
    %v456 = vadd.f32 0.0, %v455
    %v457 = vpop.f32.mrb[0].mxu0
    %458 = vdwg.mxu0
    %v460 = vrot.slane %v456, 1
    %v463 = vadd.f32 %v381, %v456
    %v464 = vadd.f32 %v382, %v460
    %v465 = vtanh.pop %v463
    %v466 = vtanh.pop %v464
    %467 = vst.msk [vmem:[%s3 + $0x4] sm:$0x1] %vm113, %v465
    %468 = vst.msk [vmem:[%s3 + $0xc] sm:$0x1] %vm113, %v466
    %v469 = vld [vmem:[%s0 + $0x5] sm:$0x1]
    %v470 = vld [vmem:[%s0 + $0xd] sm:$0x1]
    %v473 = vrot.slane %v466, 7
    %v474 = vsel %vm121, %v473, %v465
    %v475 = vsel %vm31, %v474, 0
    %477 = vmatprep.subr.mxu0 0.0
    %478 = vmatpush1.msra.mxu0 %v24
    %479 = vmatprep.subr.mxu0 0.0
    %480 = vmatpush1.msra.mxu0 %v25
    %481 = vmatprep.subr.mxu0 0.0
    %482 = vmatpush1.msra.mxu0 %v26
    %483 = vmatprep.subr.mxu0 0.0
    %484 = vmatpush1.msra.mxu0 %v27
    %485 = vmatprep.subr.mxu0 0.0
    %486 = vmatpush1.msra.mxu0 0.0
    %487 = vmatprep.subr.mxu0 0.0
    %488 = vmatpush1.msra.mxu0 0.0
    %489 = vmatprep.subr.mxu0 0.0
    %490 = vmatpush1.msra.mxu0 0.0
    %491 = vmatprep.subr.mxu0 0.0
    %492 = vmatpush1.msra.mxu0 0.0
    %493 = vmatprep.subr.mxu0 0.0
    %494 = vmatpush1.msra.mxu0 0.0
    %495 = vmatprep.subr.mxu0 0.0
    %496 = vmatpush1.msra.mxu0 0.0
    %497 = vmatprep.subr.mxu0 0.0
    %498 = vmatpush1.msra.mxu0 0.0
    %499 = vmatprep.subr.mxu0 0.0
    %500 = vmatpush1.msra.mxu0 0.0
    %501 = vmatprep.subr.mxu0 0.0
    %502 = vmatpush1.msra.mxu0 0.0
    %503 = vmatprep.subr.mxu0 0.0
    %504 = vmatpush1.msra.mxu0 0.0
    %505 = vmatprep.subr.mxu0 0.0
    %506 = vmatpush1.msra.mxu0 0.0
    %507 = vmatprep.subr.mxu0 0.0
    %508 = vmatpush1.msra.mxu0 0.0
    %509 = vmatprep.subr.mxu0 0.0
    %510 = vmatpush1.msra.mxu0 0.0
    %511 = vmatprep.subr.mxu0 0.0
    %512 = vmatpush1.msra.mxu0 0.0
    %513 = vmatprep.subr.mxu0 0.0
    %514 = vmatpush1.msra.mxu0 0.0
    %515 = vmatprep.subr.mxu0 0.0
    %516 = vmatpush1.msra.mxu0 0.0
    %517 = vmatprep.subr.mxu0 0.0
    %518 = vmatpush1.msra.mxu0 0.0
    %519 = vmatprep.subr.mxu0 0.0
    %520 = vmatpush1.msra.mxu0 0.0
    %521 = vmatprep.subr.mxu0 0.0
    %522 = vmatpush1.msra.mxu0 0.0
    %523 = vmatprep.subr.mxu0 0.0
    %524 = vmatpush1.msra.mxu0 0.0
    %525 = vmatprep.subr.mxu0 0.0
    %526 = vmatpush1.msra.mxu0 0.0
    %527 = vmatprep.subr.mxu0 0.0
    %528 = vmatpush1.msra.mxu0 0.0
    %529 = vmatprep.subr.mxu0 0.0
    %530 = vmatpush1.msra.mxu0 0.0
    %531 = vmatprep.subr.mxu0 0.0
    %532 = vmatpush1.msra.mxu0 0.0
    %533 = vmatprep.subr.mxu0 0.0
    %534 = vmatpush1.msra.mxu0 0.0
    %535 = vmatprep.subr.mxu0 0.0
    %536 = vmatpush1.msra.mxu0 0.0
    %537 = vmatprep.subr.mxu0 0.0
    %538 = vmatpush1.msra.mxu0 0.0
    %539 = vmatprep.subr.mxu0 0.0
    %540 = vmatpush1.msra.mxu0 0.0
    %541 = vmatprep.mubr.f32.mxu0 0.0
    %542 = vmatmul.mubr.f32.gmra.mrb[0].mxu0 %v475
    %v543 = vpop.f32.mrb[0].mxu0
    %v544 = vadd.f32 0.0, %v543
    %v545 = vpop.f32.mrb[0].mxu0
    %546 = vdwg.mxu0
    %v548 = vrot.slane %v544, 1
    %v551 = vadd.f32 %v469, %v544
    %v552 = vadd.f32 %v470, %v548
    %v553 = vtanh.pop %v551
    %v554 = vtanh.pop %v552
    %555 = vst.msk [vmem:[%s3 + $0x5] sm:$0x1] %vm113, %v553
    %556 = vst.msk [vmem:[%s3 + $0xd] sm:$0x1] %vm113, %v554
    %v557 = vld [vmem:[%s0 + $0x6] sm:$0x1]
    %v558 = vld [vmem:[%s0 + $0xe] sm:$0x1]
    %v561 = vrot.slane %v554, 7
    %v562 = vsel %vm121, %v561, %v553
    %v563 = vsel %vm31, %v562, 0
    %565 = vmatprep.subr.mxu0 0.0
    %566 = vmatpush1.msra.mxu0 %v24
    %567 = vmatprep.subr.mxu0 0.0
    %568 = vmatpush1.msra.mxu0 %v25
    %569 = vmatprep.subr.mxu0 0.0
    %570 = vmatpush1.msra.mxu0 %v26
    %571 = vmatprep.subr.mxu0 0.0
    %572 = vmatpush1.msra.mxu0 %v27
    %573 = vmatprep.subr.mxu0 0.0
    %574 = vmatpush1.msra.mxu0 0.0
    %575 = vmatprep.subr.mxu0 0.0
    %576 = vmatpush1.msra.mxu0 0.0
    %577 = vmatprep.subr.mxu0 0.0
    %578 = vmatpush1.msra.mxu0 0.0
    %579 = vmatprep.subr.mxu0 0.0
    %580 = vmatpush1.msra.mxu0 0.0
    %581 = vmatprep.subr.mxu0 0.0
    %582 = vmatpush1.msra.mxu0 0.0
    %583 = vmatprep.subr.mxu0 0.0
    %584 = vmatpush1.msra.mxu0 0.0
    %585 = vmatprep.subr.mxu0 0.0
    %586 = vmatpush1.msra.mxu0 0.0
    %587 = vmatprep.subr.mxu0 0.0
    %588 = vmatpush1.msra.mxu0 0.0
    %589 = vmatprep.subr.mxu0 0.0
    %590 = vmatpush1.msra.mxu0 0.0
    %591 = vmatprep.subr.mxu0 0.0
    %592 = vmatpush1.msra.mxu0 0.0
    %593 = vmatprep.subr.mxu0 0.0
    %594 = vmatpush1.msra.mxu0 0.0
    %595 = vmatprep.subr.mxu0 0.0
    %596 = vmatpush1.msra.mxu0 0.0
    %597 = vmatprep.subr.mxu0 0.0
    %598 = vmatpush1.msra.mxu0 0.0
    %599 = vmatprep.subr.mxu0 0.0
    %600 = vmatpush1.msra.mxu0 0.0
    %601 = vmatprep.subr.mxu0 0.0
    %602 = vmatpush1.msra.mxu0 0.0
    %603 = vmatprep.subr.mxu0 0.0
    %604 = vmatpush1.msra.mxu0 0.0
    %605 = vmatprep.subr.mxu0 0.0
    %606 = vmatpush1.msra.mxu0 0.0
    %607 = vmatprep.subr.mxu0 0.0
    %608 = vmatpush1.msra.mxu0 0.0
    %609 = vmatprep.subr.mxu0 0.0
    %610 = vmatpush1.msra.mxu0 0.0
    %611 = vmatprep.subr.mxu0 0.0
    %612 = vmatpush1.msra.mxu0 0.0
    %613 = vmatprep.subr.mxu0 0.0
    %614 = vmatpush1.msra.mxu0 0.0
    %615 = vmatprep.subr.mxu0 0.0
    %616 = vmatpush1.msra.mxu0 0.0
    %617 = vmatprep.subr.mxu0 0.0
    %618 = vmatpush1.msra.mxu0 0.0
    %619 = vmatprep.subr.mxu0 0.0
    %620 = vmatpush1.msra.mxu0 0.0
    %621 = vmatprep.subr.mxu0 0.0
    %622 = vmatpush1.msra.mxu0 0.0
    %623 = vmatprep.subr.mxu0 0.0
    %624 = vmatpush1.msra.mxu0 0.0
    %625 = vmatprep.subr.mxu0 0.0
    %626 = vmatpush1.msra.mxu0 0.0
    %627 = vmatprep.subr.mxu0 0.0
    %628 = vmatpush1.msra.mxu0 0.0
    %629 = vmatprep.mubr.f32.mxu0 0.0
    %630 = vmatmul.mubr.f32.gmra.mrb[0].mxu0 %v563
    %v631 = vpop.f32.mrb[0].mxu0
    %v632 = vadd.f32 0.0, %v631
    %v633 = vpop.f32.mrb[0].mxu0
    %634 = vdwg.mxu0
    %v636 = vrot.slane %v632, 1
    %v639 = vadd.f32 %v557, %v632
    %v640 = vadd.f32 %v558, %v636
    %v641 = vtanh.pop %v639
    %v642 = vtanh.pop %v640
    %643 = vst.msk [vmem:[%s3 + $0x6] sm:$0x1] %vm113, %v641
    %644 = vst.msk [vmem:[%s3 + $0xe] sm:$0x1] %vm113, %v642
    %v645 = vld [vmem:[%s0 + $0x7] sm:$0x1]
    %v646 = vld [vmem:[%s0 + $0xf] sm:$0x1]
    %v649 = vrot.slane %v642, 7
    %v650 = vsel %vm121, %v649, %v641
    %v651 = vsel %vm31, %v650, 0
    %653 = vmatprep.subr.mxu0 0.0
    %654 = vmatpush1.msra.mxu0 %v24
    %655 = vmatprep.subr.mxu0 0.0
    %656 = vmatpush1.msra.mxu0 %v25
    %657 = vmatprep.subr.mxu0 0.0
    %658 = vmatpush1.msra.mxu0 %v26
    %659 = vmatprep.subr.mxu0 0.0
    %660 = vmatpush1.msra.mxu0 %v27
    %661 = vmatprep.subr.mxu0 0.0
    %662 = vmatpush1.msra.mxu0 0.0
    %663 = vmatprep.subr.mxu0 0.0
    %664 = vmatpush1.msra.mxu0 0.0
    %665 = vmatprep.subr.mxu0 0.0
    %666 = vmatpush1.msra.mxu0 0.0
    %667 = vmatprep.subr.mxu0 0.0
    %668 = vmatpush1.msra.mxu0 0.0
    %669 = vmatprep.subr.mxu0 0.0
    %670 = vmatpush1.msra.mxu0 0.0
    %671 = vmatprep.subr.mxu0 0.0
    %672 = vmatpush1.msra.mxu0 0.0
    %673 = vmatprep.subr.mxu0 0.0
    %674 = vmatpush1.msra.mxu0 0.0
    %675 = vmatprep.subr.mxu0 0.0
    %676 = vmatpush1.msra.mxu0 0.0
    %677 = vmatprep.subr.mxu0 0.0
    %678 = vmatpush1.msra.mxu0 0.0
    %679 = vmatprep.subr.mxu0 0.0
    %680 = vmatpush1.msra.mxu0 0.0
    %681 = vmatprep.subr.mxu0 0.0
    %682 = vmatpush1.msra.mxu0 0.0
    %683 = vmatprep.subr.mxu0 0.0
    %684 = vmatpush1.msra.mxu0 0.0
    %685 = vmatprep.subr.mxu0 0.0
    %686 = vmatpush1.msra.mxu0 0.0
    %687 = vmatprep.subr.mxu0 0.0
    %688 = vmatpush1.msra.mxu0 0.0
    %689 = vmatprep.subr.mxu0 0.0
    %690 = vmatpush1.msra.mxu0 0.0
    %691 = vmatprep.subr.mxu0 0.0
    %692 = vmatpush1.msra.mxu0 0.0
    %693 = vmatprep.subr.mxu0 0.0
    %694 = vmatpush1.msra.mxu0 0.0
    %695 = vmatprep.subr.mxu0 0.0
    %696 = vmatpush1.msra.mxu0 0.0
    %697 = vmatprep.subr.mxu0 0.0
    %698 = vmatpush1.msra.mxu0 0.0
    %699 = vmatprep.subr.mxu0 0.0
    %700 = vmatpush1.msra.mxu0 0.0
    %701 = vmatprep.subr.mxu0 0.0
    %702 = vmatpush1.msra.mxu0 0.0
    %703 = vmatprep.subr.mxu0 0.0
    %704 = vmatpush1.msra.mxu0 0.0
    %705 = vmatprep.subr.mxu0 0.0
    %706 = vmatpush1.msra.mxu0 0.0
    %707 = vmatprep.subr.mxu0 0.0
    %708 = vmatpush1.msra.mxu0 0.0
    %709 = vmatprep.subr.mxu0 0.0
    %710 = vmatpush1.msra.mxu0 0.0
    %711 = vmatprep.subr.mxu0 0.0
    %712 = vmatpush1.msra.mxu0 0.0
    %713 = vmatprep.subr.mxu0 0.0
    %714 = vmatpush1.msra.mxu0 0.0
    %715 = vmatprep.subr.mxu0 0.0
    %716 = vmatpush1.msra.mxu0 0.0
    %717 = vmatprep.mubr.f32.mxu0 0.0
    %718 = vmatmul.mubr.f32.gmra.mrb[0].mxu0 %v651
    %v719 = vpop.f32.mrb[0].mxu0
    %v720 = vadd.f32 0.0, %v719
    %v721 = vpop.f32.mrb[0].mxu0
    %722 = vdwg.mxu0
    %v724 = vrot.slane %v720, 1
    %v727 = vadd.f32 %v645, %v720
    %v728 = vadd.f32 %v646, %v724
    %v729 = vtanh.pop %v727
    %v730 = vtanh.pop %v728
    %731 = vst.msk [vmem:[%s3 + $0x7] sm:$0x1] %vm113, %v729
    %732 = vst.msk [vmem:[%s3 + $0xf] sm:$0x1] %vm113, %v730
    %v735 = vrot.slane %v730, 7
    %v736 = vsel %vm121, %v735, %v729
    %vm738 = vcmask 254976
    %739 = vst.msk [vmem:[#allocation2] sm:$0x3] %vm738, %v736
    // Predicated region
    $region18: #{char_rnn_forward.4} parent=1 // pred_check
      _
    $region19: #{char_rnn_forward.4} parent=1 // pred_check_branch
      %741 = sbr.rel (0) target = $region21
    $region20: #{char_rnn_forward.4} parent=1 // pred_region
      _
    $region21: #{char_rnn_forward.4} parent=1 // pred_fallthru
      _
    // Predicated region
    $region22: #{char_rnn_forward.4} parent=1 // pred_check
      _
    $region23: #{char_rnn_forward.4} parent=1 // pred_check_branch
      %743 = sbr.rel (0) target = $region25
    $region24: #{char_rnn_forward.4} parent=1 // pred_region
      %s745 = ssub.s32 32, 32
      %746 = vsyncadd [#allocation3], %s745
      %s748 = sshll.u32 [#allocation2], 4
      %s749 = int_to_ptr.vmem [resolvable:$true] %s748
      %751 = dma.vmem_to_hbm [thread:$0]  %s749, 32, %s4, [#allocation3]
    $region25: #{char_rnn_forward.4} parent=1 // pred_fallthru
      _
    // Predicated region
    $region26: #{char_rnn_forward.4} parent=1 // pred_check
      _
    $region27: #{char_rnn_forward.4} parent=1 // pred_check_branch
      %753 = sbr.rel (0) target = $region29
    $region28: #{char_rnn_forward.4} parent=1 // pred_region
      _
    $region29: #{char_rnn_forward.4} parent=1 // pred_fallthru
      _
    // Predicated region
    $region30: #{char_rnn_forward.4} parent=1 // pred_check
      _
    $region31: #{char_rnn_forward.4} parent=1 // pred_check_branch
      %755 = sbr.rel (0) target = $region33
    $region32: #{char_rnn_forward.4} parent=1 // pred_region
      %756 = dma.done [#allocation3], 32
    $region33: #{char_rnn_forward.4} parent=1 // pred_fallthru
      _
    %757 = vsyncpa [#allocation3], 1

</llo_original>
